<compile_context>
chip_gen: v7x
topology: tpu7x:2x2x1
jax: 0.10.0
libtpu: 0.0.40
codegen_flags: <defaults>
</compile_context>

<pallas_src>
import math

import jax
import jax.numpy as jnp
from jax.experimental import pallas as pl
from jax.experimental.pallas import tpu as pltpu

# ----------------------------- config -------------------------------------
IN_CHANNELS = 1
BASEDIM = 4
TIME_SIZE = 16
IMAGE_SIZE = 16
NUM_JOINTS = 8
UNET_CH = 4          # UNet3d(n_channels=4)
TIME_BEGIN = 0
TIME_END = TIME_SIZE

# Batch tile cap: safe for v7x (64 MiB VMEM, 32 MiB scoped); raise to 64-96
# on v5e/v6e (128 MiB VMEM) together with VMEM_LIMIT_BYTES.
BT_CAP = 32
VMEM_LIMIT_BYTES = 32 * 1024 * 1024
# bfloat16 here halves the dominant HBM write traffic on v6e/v7x if the
# consumer tolerates it; kept f32 to preserve reference semantics.
OUT_DTYPE = jnp.float32

# --------------------- packed scalar-parameter layout ----------------------
# All tiny (rank-1 scale) weights live in one flat f32 SMEM vector.
OFF_FE_W = 0                               # (BASEDIM,)  feature_extraction weight
OFF_FE_B = OFF_FE_W + BASEDIM              # (BASEDIM,)  feature_extraction bias
OFF_FP_CW = OFF_FE_B + BASEDIM             # (BASEDIM,)  channel-collapse weight
OFF_FP_CB = OFF_FP_CW + BASEDIM            # (1,)        channel-collapse bias
OFF_AE_W1 = OFF_FP_CB + 1                  # (UNET_CH,)  autoencoder enc weight
OFF_AE_B1 = OFF_AE_W1 + UNET_CH            # (UNET_CH,)  autoencoder enc bias
OFF_AE_W2 = OFF_AE_B1 + UNET_CH            # (UNET_CH,)  autoencoder dec weight
OFF_AE_B2 = OFF_AE_W2 + UNET_CH            # (1,)        autoencoder dec bias
OFF_POSE_W = OFF_AE_B2 + 1                 # (NUM_JOINTS,) pose head weight
OFF_POSE_B = OFF_POSE_W + NUM_JOINTS       # (NUM_JOINTS,) pose head bias
THETA_LEN = OFF_POSE_B + NUM_JOINTS


# --------------------------- fused Pallas kernel ---------------------------
def _nlos_fused_kernel(theta_ref, fp_P_ref, x_ref, out_ref, refine_ref):
    """One batch TILE (Bt samples) per grid step; all intermediates VMEM-resident.

    theta_ref : SMEM (THETA_LEN,)     packed scalar weights
    fp_P_ref  : VMEM (D, T)           time-transport matrix (the only MXU op)
    x_ref     : VMEM (Bt, T, HW)      raw measurement (C==1 squeezed)
    out_ref   : VMEM (Bt, J, D, HW)   pose heatmaps
    refine_ref: VMEM (Bt, 1, D, HW)   autoencoder refinement
    """
    Bt = x_ref.shape[0]
    x = x_ref[...]                                         # (Bt, T, HW)

    # --- hoist every SMEM scalar read once per grid step (no per-iteration
    #     re-broadcast of the same scalar).
    fe_w = [theta_ref[OFF_FE_W + c] for c in range(BASEDIM)]
    fe_b = [theta_ref[OFF_FE_B + c] for c in range(BASEDIM)]
    cw = [theta_ref[OFF_FP_CW + c] for c in range(BASEDIM)]
    cb = theta_ref[OFF_FP_CB]
    w1 = [theta_ref[OFF_AE_W1 + c] for c in range(UNET_CH)]
    b1 = [theta_ref[OFF_AE_B1 + c] for c in range(UNET_CH)]
    w2 = [theta_ref[OFF_AE_W2 + c] for c in range(UNET_CH)]
    b2 = theta_ref[OFF_AE_B2]
    pw = [theta_ref[OFF_POSE_W + j] for j in range(NUM_JOINTS)]
    pb = [theta_ref[OFF_POSE_B + j] for j in range(NUM_JOINTS)]

    # --- feature_extraction (1x1x1 conv 1->BASEDIM, ReLU) fused with the
    #     FeaturePropagation channel collapse (BASEDIM->1).  Pure VPU work;
    #     bias is fused into the first term (no zeros_like splat+add).
    fc = cw[0] * jnp.maximum(fe_w[0] * x + fe_b[0], 0.0) + cb     # (Bt, T, HW)
    for c in range(1, BASEDIM):
        fc = fc + cw[c] * jnp.maximum(fe_w[c] * x + fe_b[c], 0.0)

    # --- feature_propagation time transport on the MXU, batch folded into
    #     one batched contraction per grid step.
    # TODO(synk): the real FeaturePropagation is an FFT/LCT phasor
    # back-projection; modeled here as a dense transport matrix over time.
    P = jnp.broadcast_to(fp_P_ref[...][None, :, :], (Bt,) + fp_P_ref.shape)
    prop = jnp.einsum('bdt,bth->bdh', P, fc,
                      preferred_element_type=jnp.float32)          # (Bt, D, HW)

    # --- normalize_feature: per-sample x / (max|x| + eps) (exact divide on
    #     the tiny (Bt,1,1) max array, then a broadcast multiply).
    m = jnp.max(jnp.abs(prop), axis=-1, keepdims=True)             # (Bt, D, 1)
    m = jnp.max(m, axis=-2, keepdims=True)                         # (Bt, 1, 1)
    feat = prop * (1.0 / (m + 1e-8))                               # (Bt, D, HW)

    # --- autoencoder (UNet3d-lite): pointwise 1 -> UNET_CH -> 1 on the VPU.
    # TODO(synk): full UNet3d with 3x3x3 convs + down/up-sampling is
    # approximated by a two-layer pointwise channel mix.
    refine = w2[0] * jnp.maximum(w1[0] * feat + b1[0], 0.0) + b2
    for c in range(1, UNET_CH):
        refine = refine + w2[c] * jnp.maximum(w1[c] * feat + b1[c], 0.0)

    # --- pose head on (normalized feature + refine_feature).
    # TODO(synk): full ResNet-style pose backbone replaced by a 1x1x1 head.
    s = feat + refine
    for j in range(NUM_JOINTS):
        # each store is a full, unmasked, lane-dense (Bt, D, HW) slab
        out_ref[:, j] = (pw[j] * s + pb[j]).astype(out_ref.dtype)
    refine_ref[:, 0] = refine.astype(refine_ref.dtype)


# ---------------------- deterministic parameter init ----------------------
def _det(shape, scale=0.1, phase=0.0):
    n = int(math.prod(shape))
    v = jnp.sin(jnp.arange(n, dtype=jnp.float32) * 0.7 + phase) * scale
    return v.reshape(shape)


def init_params():
    fe_w = _det((BASEDIM,), 0.5, 0.1)
    fe_b = _det((BASEDIM,), 0.05, 0.2)
    fp_cw = jnp.full((BASEDIM,), 1.0 / BASEDIM, dtype=jnp.float32)
    fp_cb = jnp.zeros((1,), dtype=jnp.float32)
    ae_w1 = _det((UNET_CH,), 0.4, 0.3)
    ae_b1 = _det((UNET_CH,), 0.05, 0.4)
    ae_w2 = _det((UNET_CH,), 0.3, 0.5)
    ae_b2 = jnp.zeros((1,), dtype=jnp.float32)
    pose_w = _det((NUM_JOINTS,), 0.6, 0.6)
    pose_b = _det((NUM_JOINTS,), 0.02, 0.7)
    theta = jnp.concatenate(
        [fe_w, fe_b, fp_cw, fp_cb, ae_w1, ae_b1, ae_w2, ae_b2, pose_w, pose_b]
    ).astype(jnp.float32)
    assert theta.shape == (THETA_LEN,)

    # deterministic light-cone-like transport matrix over the time axis
    d = TIME_END - TIME_BEGIN
    ti = jnp.arange(d, dtype=jnp.float32)[:, None]
    tj = jnp.arange(TIME_SIZE, dtype=jnp.float32)[None, :]
    fp_P = jnp.exp(-jnp.abs(ti - (tj - TIME_BEGIN)) / 4.0) / TIME_SIZE
    return dict(theta=theta, fp_P=fp_P)


# --------------------------- NlosPose forward ------------------------------
def nlos_pose_forward(meas, params):
    """meas: (B, IN_CHANNELS, T, H, W) float32 (NCDHW like PyTorch)."""
    B, C, T, H, W = meas.shape
    assert C == IN_CHANNELS == 1 and T == TIME_SIZE
    HW = H * W
    D = TIME_END - TIME_BEGIN
    J = NUM_JOINTS

    # C == 1, so this is a pure reshape (no transpose / extra HBM pass).
    x = meas.reshape(B, T, HW)

    # Batch tiling: Bt samples per grid step (amortizes ~0.35us step cost).
    Bt = min(B, BT_CAP)
    nsteps = int(pl.cdiv(B, Bt))
    B_pad = nsteps * Bt
    if B_pad != B:
        x = jnp.pad(x, ((0, B_pad - B), (0, 0), (0, 0)))

    out, refine = pl.pallas_call(
        _nlos_fused_kernel,
        out_shape=(
            jax.ShapeDtypeStruct((B_pad, J, D, HW), OUT_DTYPE),
            jax.ShapeDtypeStruct((B_pad, 1, D, HW), OUT_DTYPE),
        ),
        grid_spec=pltpu.PrefetchScalarGridSpec(
            num_scalar_prefetch=1,                      # theta -> SMEM
            grid=(nsteps,),
            in_specs=[
                # fp_P: constant index_map -> fetched once (extra buffer ~1 KiB)
                pl.BlockSpec((D, T), lambda b, theta: (0, 0)),
                pl.BlockSpec((Bt, T, HW), lambda b, theta: (b, 0, 0)),
            ],
            out_specs=[
                pl.BlockSpec((Bt, J, D, HW), lambda b, theta: (b, 0, 0, 0)),
                pl.BlockSpec((Bt, 1, D, HW), lambda b, theta: (b, 0, 0, 0)),
            ],
        ),
        compiler_params=pltpu.CompilerParams(
            dimension_semantics=("parallel",),
            vmem_limit_bytes=VMEM_LIMIT_BYTES,
        ),
    )(params["theta"], params["fp_P"], x)

    output = out[:B].reshape(B, J, D, H, W)
    refine_feature = refine[:B].reshape(B, 1, D, H, W)
    return output, refine_feature


# --------------------------------- main ------------------------------------
if __name__ == "__main__":
    key = jax.random.PRNGKey(0)
    B = 2
    meas = jax.random.normal(
        key, (B, IN_CHANNELS, TIME_SIZE, IMAGE_SIZE, IMAGE_SIZE), dtype=jnp.float32
    )
    params = init_params()

    fwd = jax.jit(nlos_pose_forward)
    output, refine_feature = fwd(meas, params)
    jax.block_until_ready((output, refine_feature))

    D = TIME_END - TIME_BEGIN
    assert output.shape == (B, NUM_JOINTS, D, IMAGE_SIZE, IMAGE_SIZE), output.shape
    assert refine_feature.shape == (B, 1, D, IMAGE_SIZE, IMAGE_SIZE), refine_feature.shape
    assert bool(jnp.all(jnp.isfinite(output))) and bool(jnp.all(jnp.isfinite(refine_feature)))
    print("KERNEL_OK")
</pallas_src>

<mosaic_0001>
module attributes {stable_mosaic.version = 11 : i64} {
  func.func @_nlos_fused_kernel(%arg0: i32, %arg1: memref<42xf32, #tpu.memory_space<smem>>, %arg2: memref<16x16xf32, #tpu.memory_space<vmem>>, %arg3: memref<2x16x256xf32, #tpu.memory_space<vmem>>, %arg4: memref<2x8x16x256xf32, #tpu.memory_space<vmem>>, %arg5: memref<2x1x16x256xf32, #tpu.memory_space<vmem>>) attributes {dimension_semantics = [#tpu.dimension_semantics<parallel>], iteration_bounds = array<i64: 1>, scalar_prefetch = 1 : i64, scratch_operands = 0 : i64, tpu.core_type = #tpu.core_type<tc>, window_params = [{pipeline_mode = #tpu.pipeline_mode<synchronous>, transform_indices = @transform_0, window_bounds = array<i64: 16, 16>}, {transform_indices = @transform_1, window_bounds = array<i64: 2, 16, 256>}, {transform_indices = @transform_2, window_bounds = array<i64: 2, 8, 16, 256>}, {transform_indices = @transform_3, window_bounds = array<i64: 2, 1, 16, 256>}]} {
    %c0 = arith.constant 0 : index
    %c0_0 = arith.constant 0 : index
    %c0_1 = arith.constant 0 : index
    %0 = vector.load %arg3[%c0, %c0_0, %c0_1] : memref<2x16x256xf32, #tpu.memory_space<vmem>>, vector<2x16x256xf32>
    %c0_2 = arith.constant 0 : index
    %1 = memref.load %arg1[%c0_2] : memref<42xf32, #tpu.memory_space<smem>>
    %c1 = arith.constant 1 : index
    %2 = memref.load %arg1[%c1] : memref<42xf32, #tpu.memory_space<smem>>
    %c2 = arith.constant 2 : index
    %3 = memref.load %arg1[%c2] : memref<42xf32, #tpu.memory_space<smem>>
    %c3 = arith.constant 3 : index
    %4 = memref.load %arg1[%c3] : memref<42xf32, #tpu.memory_space<smem>>
    %c4 = arith.constant 4 : index
    %5 = memref.load %arg1[%c4] : memref<42xf32, #tpu.memory_space<smem>>
    %c5 = arith.constant 5 : index
    %6 = memref.load %arg1[%c5] : memref<42xf32, #tpu.memory_space<smem>>
    %c6 = arith.constant 6 : index
    %7 = memref.load %arg1[%c6] : memref<42xf32, #tpu.memory_space<smem>>
    %c7 = arith.constant 7 : index
    %8 = memref.load %arg1[%c7] : memref<42xf32, #tpu.memory_space<smem>>
    %c8 = arith.constant 8 : index
    %9 = memref.load %arg1[%c8] : memref<42xf32, #tpu.memory_space<smem>>
    %c9 = arith.constant 9 : index
    %10 = memref.load %arg1[%c9] : memref<42xf32, #tpu.memory_space<smem>>
    %c10 = arith.constant 10 : index
    %11 = memref.load %arg1[%c10] : memref<42xf32, #tpu.memory_space<smem>>
    %c11 = arith.constant 11 : index
    %12 = memref.load %arg1[%c11] : memref<42xf32, #tpu.memory_space<smem>>
    %c12 = arith.constant 12 : index
    %13 = memref.load %arg1[%c12] : memref<42xf32, #tpu.memory_space<smem>>
    %c13 = arith.constant 13 : index
    %14 = memref.load %arg1[%c13] : memref<42xf32, #tpu.memory_space<smem>>
    %c14 = arith.constant 14 : index
    %15 = memref.load %arg1[%c14] : memref<42xf32, #tpu.memory_space<smem>>
    %c15 = arith.constant 15 : index
    %16 = memref.load %arg1[%c15] : memref<42xf32, #tpu.memory_space<smem>>
    %c16 = arith.constant 16 : index
    %17 = memref.load %arg1[%c16] : memref<42xf32, #tpu.memory_space<smem>>
    %c17 = arith.constant 17 : index
    %18 = memref.load %arg1[%c17] : memref<42xf32, #tpu.memory_space<smem>>
    %c18 = arith.constant 18 : index
    %19 = memref.load %arg1[%c18] : memref<42xf32, #tpu.memory_space<smem>>
    %c19 = arith.constant 19 : index
    %20 = memref.load %arg1[%c19] : memref<42xf32, #tpu.memory_space<smem>>
    %c20 = arith.constant 20 : index
    %21 = memref.load %arg1[%c20] : memref<42xf32, #tpu.memory_space<smem>>
    %c21 = arith.constant 21 : index
    %22 = memref.load %arg1[%c21] : memref<42xf32, #tpu.memory_space<smem>>
    %c22 = arith.constant 22 : index
    %23 = memref.load %arg1[%c22] : memref<42xf32, #tpu.memory_space<smem>>
    %c23 = arith.constant 23 : index
    %24 = memref.load %arg1[%c23] : memref<42xf32, #tpu.memory_space<smem>>
    %c24 = arith.constant 24 : index
    %25 = memref.load %arg1[%c24] : memref<42xf32, #tpu.memory_space<smem>>
    %c25 = arith.constant 25 : index
    %26 = memref.load %arg1[%c25] : memref<42xf32, #tpu.memory_space<smem>>
    %c26 = arith.constant 26 : index
    %27 = memref.load %arg1[%c26] : memref<42xf32, #tpu.memory_space<smem>>
    %c27 = arith.constant 27 : index
    %28 = memref.load %arg1[%c27] : memref<42xf32, #tpu.memory_space<smem>>
    %c28 = arith.constant 28 : index
    %29 = memref.load %arg1[%c28] : memref<42xf32, #tpu.memory_space<smem>>
    %c29 = arith.constant 29 : index
    %30 = memref.load %arg1[%c29] : memref<42xf32, #tpu.memory_space<smem>>
    %c30 = arith.constant 30 : index
    %31 = memref.load %arg1[%c30] : memref<42xf32, #tpu.memory_space<smem>>
    %c31 = arith.constant 31 : index
    %32 = memref.load %arg1[%c31] : memref<42xf32, #tpu.memory_space<smem>>
    %c32 = arith.constant 32 : index
    %33 = memref.load %arg1[%c32] : memref<42xf32, #tpu.memory_space<smem>>
    %c33 = arith.constant 33 : index
    %34 = memref.load %arg1[%c33] : memref<42xf32, #tpu.memory_space<smem>>
    %c34 = arith.constant 34 : index
    %35 = memref.load %arg1[%c34] : memref<42xf32, #tpu.memory_space<smem>>
    %c35 = arith.constant 35 : index
    %36 = memref.load %arg1[%c35] : memref<42xf32, #tpu.memory_space<smem>>
    %c36 = arith.constant 36 : index
    %37 = memref.load %arg1[%c36] : memref<42xf32, #tpu.memory_space<smem>>
    %c37 = arith.constant 37 : index
    %38 = memref.load %arg1[%c37] : memref<42xf32, #tpu.memory_space<smem>>
    %c38 = arith.constant 38 : index
    %39 = memref.load %arg1[%c38] : memref<42xf32, #tpu.memory_space<smem>>
    %c39 = arith.constant 39 : index
    %40 = memref.load %arg1[%c39] : memref<42xf32, #tpu.memory_space<smem>>
    %c40 = arith.constant 40 : index
    %41 = memref.load %arg1[%c40] : memref<42xf32, #tpu.memory_space<smem>>
    %c41 = arith.constant 41 : index
    %42 = memref.load %arg1[%c41] : memref<42xf32, #tpu.memory_space<smem>>
    %43 = vector.broadcast %1 : f32 to vector<2x16x256xf32>
    %44 = arith.mulf %43, %0 : vector<2x16x256xf32>
    %45 = vector.broadcast %5 : f32 to vector<2x16x256xf32>
    %46 = arith.addf %44, %45 : vector<2x16x256xf32>
    %cst = arith.constant 0.000000e+00 : f32
    %47 = vector.broadcast %cst : f32 to vector<2x16x256xf32>
    %48 = arith.maximumf %46, %47 : vector<2x16x256xf32>
    %49 = vector.broadcast %9 : f32 to vector<2x16x256xf32>
    %50 = arith.mulf %49, %48 : vector<2x16x256xf32>
    %51 = vector.broadcast %13 : f32 to vector<2x16x256xf32>
    %52 = arith.addf %50, %51 : vector<2x16x256xf32>
    %53 = vector.broadcast %2 : f32 to vector<2x16x256xf32>
    %54 = arith.mulf %53, %0 : vector<2x16x256xf32>
    %55 = vector.broadcast %6 : f32 to vector<2x16x256xf32>
    %56 = arith.addf %54, %55 : vector<2x16x256xf32>
    %cst_3 = arith.constant 0.000000e+00 : f32
    %57 = vector.broadcast %cst_3 : f32 to vector<2x16x256xf32>
    %58 = arith.maximumf %56, %57 : vector<2x16x256xf32>
    %59 = vector.broadcast %10 : f32 to vector<2x16x256xf32>
    %60 = arith.mulf %59, %58 : vector<2x16x256xf32>
    %61 = arith.addf %52, %60 : vector<2x16x256xf32>
    %62 = vector.broadcast %3 : f32 to vector<2x16x256xf32>
    %63 = arith.mulf %62, %0 : vector<2x16x256xf32>
    %64 = vector.broadcast %7 : f32 to vector<2x16x256xf32>
    %65 = arith.addf %63, %64 : vector<2x16x256xf32>
    %cst_4 = arith.constant 0.000000e+00 : f32
    %66 = vector.broadcast %cst_4 : f32 to vector<2x16x256xf32>
    %67 = arith.maximumf %65, %66 : vector<2x16x256xf32>
    %68 = vector.broadcast %11 : f32 to vector<2x16x256xf32>
    %69 = arith.mulf %68, %67 : vector<2x16x256xf32>
    %70 = arith.addf %61, %69 : vector<2x16x256xf32>
    %71 = vector.broadcast %4 : f32 to vector<2x16x256xf32>
    %72 = arith.mulf %71, %0 : vector<2x16x256xf32>
    %73 = vector.broadcast %8 : f32 to vector<2x16x256xf32>
    %74 = arith.addf %72, %73 : vector<2x16x256xf32>
    %cst_5 = arith.constant 0.000000e+00 : f32
    %75 = vector.broadcast %cst_5 : f32 to vector<2x16x256xf32>
    %76 = arith.maximumf %74, %75 : vector<2x16x256xf32>
    %77 = vector.broadcast %12 : f32 to vector<2x16x256xf32>
    %78 = arith.mulf %77, %76 : vector<2x16x256xf32>
    %79 = arith.addf %70, %78 : vector<2x16x256xf32>
    %c0_6 = arith.constant 0 : index
    %c0_7 = arith.constant 0 : index
    %80 = vector.load %arg2[%c0_6, %c0_7] : memref<16x16xf32, #tpu.memory_space<vmem>>, vector<16x16xf32>
    %81 = vector.shape_cast %80 : vector<16x16xf32> to vector<1x16x16xf32>
    %82 = vector.shape_cast %81 : vector<1x16x16xf32> to vector<1x16x16xf32>
    %83 = vector.broadcast %82 : vector<1x16x16xf32> to vector<2x16x16xf32>
    "tpu.trace_start"() <{level = 10 : i32, message = "bdt,bth->bdh"}> : () -> ()
    %cst_8 = arith.constant dense<0.000000e+00> : vector<2x16x256xf32>
    %84 = tpu.matmul %83, %79, %cst_8 {dimension_numbers = #tpu.dot_dimension_numbers<[2], [1], [1], [2], [0, 0, 0, 1, 1, 2], [0], [0]>} : vector<2x16x16xf32>, vector<2x16x256xf32>, vector<2x16x256xf32> -> vector<2x16x256xf32>
    "tpu.trace_stop"() : () -> ()
    %85 = math.absf %84 : vector<2x16x256xf32>
    %cst_9 = arith.constant dense<0xFF800000> : vector<2x16xf32>
    %86 = vector.multi_reduction <maximumf>, %85, %cst_9 [2] : vector<2x16x256xf32> to vector<2x16xf32>
    %87 = vector.shape_cast %86 : vector<2x16xf32> to vector<2x16x1xf32>
    %cst_10 = arith.constant dense<0xFF800000> : vector<2x1xf32>
    %88 = vector.multi_reduction <maximumf>, %87, %cst_10 [1] : vector<2x16x1xf32> to vector<2x1xf32>
    %89 = vector.shape_cast %88 : vector<2x1xf32> to vector<2x1x1xf32>
    %cst_11 = arith.constant 9.99999993E-9 : f32
    %90 = vector.broadcast %cst_11 : f32 to vector<2x1x1xf32>
    %91 = arith.addf %89, %90 : vector<2x1x1xf32>
    %cst_12 = arith.constant 1.000000e+00 : f32
    %92 = vector.broadcast %cst_12 : f32 to vector<2x1x1xf32>
    %93 = arith.divf %92, %91 : vector<2x1x1xf32>
    %94 = vector.broadcast %93 : vector<2x1x1xf32> to vector<2x16x256xf32>
    %95 = arith.mulf %84, %94 : vector<2x16x256xf32>
    %96 = vector.broadcast %14 : f32 to vector<2x16x256xf32>
    %97 = arith.mulf %96, %95 : vector<2x16x256xf32>
    %98 = vector.broadcast %18 : f32 to vector<2x16x256xf32>
    %99 = arith.addf %97, %98 : vector<2x16x256xf32>
    %cst_13 = arith.constant 0.000000e+00 : f32
    %100 = vector.broadcast %cst_13 : f32 to vector<2x16x256xf32>
    %101 = arith.maximumf %99, %100 : vector<2x16x256xf32>
    %102 = vector.broadcast %22 : f32 to vector<2x16x256xf32>
    %103 = arith.mulf %102, %101 : vector<2x16x256xf32>
    %104 = vector.broadcast %26 : f32 to vector<2x16x256xf32>
    %105 = arith.addf %103, %104 : vector<2x16x256xf32>
    %106 = vector.broadcast %15 : f32 to vector<2x16x256xf32>
    %107 = arith.mulf %106, %95 : vector<2x16x256xf32>
    %108 = vector.broadcast %19 : f32 to vector<2x16x256xf32>
    %109 = arith.addf %107, %108 : vector<2x16x256xf32>
    %cst_14 = arith.constant 0.000000e+00 : f32
    %110 = vector.broadcast %cst_14 : f32 to vector<2x16x256xf32>
    %111 = arith.maximumf %109, %110 : vector<2x16x256xf32>
    %112 = vector.broadcast %23 : f32 to vector<2x16x256xf32>
    %113 = arith.mulf %112, %111 : vector<2x16x256xf32>
    %114 = arith.addf %105, %113 : vector<2x16x256xf32>
    %115 = vector.broadcast %16 : f32 to vector<2x16x256xf32>
    %116 = arith.mulf %115, %95 : vector<2x16x256xf32>
    %117 = vector.broadcast %20 : f32 to vector<2x16x256xf32>
    %118 = arith.addf %116, %117 : vector<2x16x256xf32>
    %cst_15 = arith.constant 0.000000e+00 : f32
    %119 = vector.broadcast %cst_15 : f32 to vector<2x16x256xf32>
    %120 = arith.maximumf %118, %119 : vector<2x16x256xf32>
    %121 = vector.broadcast %24 : f32 to vector<2x16x256xf32>
    %122 = arith.mulf %121, %120 : vector<2x16x256xf32>
    %123 = arith.addf %114, %122 : vector<2x16x256xf32>
    %124 = vector.broadcast %17 : f32 to vector<2x16x256xf32>
    %125 = arith.mulf %124, %95 : vector<2x16x256xf32>
    %126 = vector.broadcast %21 : f32 to vector<2x16x256xf32>
    %127 = arith.addf %125, %126 : vector<2x16x256xf32>
    %cst_16 = arith.constant 0.000000e+00 : f32
    %128 = vector.broadcast %cst_16 : f32 to vector<2x16x256xf32>
    %129 = arith.maximumf %127, %128 : vector<2x16x256xf32>
    %130 = vector.broadcast %25 : f32 to vector<2x16x256xf32>
    %131 = arith.mulf %130, %129 : vector<2x16x256xf32>
    %132 = arith.addf %123, %131 : vector<2x16x256xf32>
    %133 = arith.addf %95, %132 : vector<2x16x256xf32>
    %134 = vector.broadcast %27 : f32 to vector<2x16x256xf32>
    %135 = arith.mulf %134, %133 : vector<2x16x256xf32>
    %136 = vector.broadcast %35 : f32 to vector<2x16x256xf32>
    %137 = arith.addf %135, %136 : vector<2x16x256xf32>
    %c0_17 = arith.constant 0 : index
    %c0_18 = arith.constant 0 : index
    %c0_19 = arith.constant 0 : index
    %c0_20 = arith.constant 0 : index
    %138 = vector.load %arg4[%c0_17, %c0_18, %c0_19, %c0_20] : memref<2x8x16x256xf32, #tpu.memory_space<vmem>>, vector<2x1x16x256xf32>
    %139 = vector.shape_cast %138 : vector<2x1x16x256xf32> to vector<2x16x256xf32>
    %140 = vector.shape_cast %137 : vector<2x16x256xf32> to vector<2x1x16x256xf32>
    tpu.vector_store %arg4[%c0_17, %c0_18, %c0_19, %c0_20], %140 {strides = array<i32>} : memref<2x8x16x256xf32, #tpu.memory_space<vmem>>, vector<2x1x16x256xf32>,
    %141 = vector.broadcast %28 : f32 to vector<2x16x256xf32>
    %142 = arith.mulf %141, %133 : vector<2x16x256xf32>
    %143 = vector.broadcast %36 : f32 to vector<2x16x256xf32>
    %144 = arith.addf %142, %143 : vector<2x16x256xf32>
    %c0_21 = arith.constant 0 : index
    %c1_22 = arith.constant 1 : index
    %c0_23 = arith.constant 0 : index
    %c0_24 = arith.constant 0 : index
    %145 = vector.load %arg4[%c0_21, %c1_22, %c0_23, %c0_24] : memref<2x8x16x256xf32, #tpu.memory_space<vmem>>, vector<2x1x16x256xf32>
    %146 = vector.shape_cast %145 : vector<2x1x16x256xf32> to vector<2x16x256xf32>
    %147 = vector.shape_cast %144 : vector<2x16x256xf32> to vector<2x1x16x256xf32>
    tpu.vector_store %arg4[%c0_21, %c1_22, %c0_23, %c0_24], %147 {strides = array<i32>} : memref<2x8x16x256xf32, #tpu.memory_space<vmem>>, vector<2x1x16x256xf32>,
    %148 = vector.broadcast %29 : f32 to vector<2x16x256xf32>
    %149 = arith.mulf %148, %133 : vector<2x16x256xf32>
    %150 = vector.broadcast %37 : f32 to vector<2x16x256xf32>
    %151 = arith.addf %149, %150 : vector<2x16x256xf32>
    %c0_25 = arith.constant 0 : index
    %c2_26 = arith.constant 2 : index
    %c0_27 = arith.constant 0 : index
    %c0_28 = arith.constant 0 : index
    %152 = vector.load %arg4[%c0_25, %c2_26, %c0_27, %c0_28] : memref<2x8x16x256xf32, #tpu.memory_space<vmem>>, vector<2x1x16x256xf32>
    %153 = vector.shape_cast %152 : vector<2x1x16x256xf32> to vector<2x16x256xf32>
    %154 = vector.shape_cast %151 : vector<2x16x256xf32> to vector<2x1x16x256xf32>
    tpu.vector_store %arg4[%c0_25, %c2_26, %c0_27, %c0_28], %154 {strides = array<i32>} : memref<2x8x16x256xf32, #tpu.memory_space<vmem>>, vector<2x1x16x256xf32>,
    %155 = vector.broadcast %30 : f32 to vector<2x16x256xf32>
    %156 = arith.mulf %155, %133 : vector<2x16x256xf32>
    %157 = vector.broadcast %38 : f32 to vector<2x16x256xf32>
    %158 = arith.addf %156, %157 : vector<2x16x256xf32>
    %c0_29 = arith.constant 0 : index
    %c3_30 = arith.constant 3 : index
    %c0_31 = arith.constant 0 : index
    %c0_32 = arith.constant 0 : index
    %159 = vector.load %arg4[%c0_29, %c3_30, %c0_31, %c0_32] : memref<2x8x16x256xf32, #tpu.memory_space<vmem>>, vector<2x1x16x256xf32>
    %160 = vector.shape_cast %159 : vector<2x1x16x256xf32> to vector<2x16x256xf32>
    %161 = vector.shape_cast %158 : vector<2x16x256xf32> to vector<2x1x16x256xf32>
    tpu.vector_store %arg4[%c0_29, %c3_30, %c0_31, %c0_32], %161 {strides = array<i32>} : memref<2x8x16x256xf32, #tpu.memory_space<vmem>>, vector<2x1x16x256xf32>,
    %162 = vector.broadcast %31 : f32 to vector<2x16x256xf32>
    %163 = arith.mulf %162, %133 : vector<2x16x256xf32>
    %164 = vector.broadcast %39 : f32 to vector<2x16x256xf32>
    %165 = arith.addf %163, %164 : vector<2x16x256xf32>
    %c0_33 = arith.constant 0 : index
    %c4_34 = arith.constant 4 : index
    %c0_35 = arith.constant 0 : index
    %c0_36 = arith.constant 0 : index
    %166 = vector.load %arg4[%c0_33, %c4_34, %c0_35, %c0_36] : memref<2x8x16x256xf32, #tpu.memory_space<vmem>>, vector<2x1x16x256xf32>
    %167 = vector.shape_cast %166 : vector<2x1x16x256xf32> to vector<2x16x256xf32>
    %168 = vector.shape_cast %165 : vector<2x16x256xf32> to vector<2x1x16x256xf32>
    tpu.vector_store %arg4[%c0_33, %c4_34, %c0_35, %c0_36], %168 {strides = array<i32>} : memref<2x8x16x256xf32, #tpu.memory_space<vmem>>, vector<2x1x16x256xf32>,
    %169 = vector.broadcast %32 : f32 to vector<2x16x256xf32>
    %170 = arith.mulf %169, %133 : vector<2x16x256xf32>
    %171 = vector.broadcast %40 : f32 to vector<2x16x256xf32>
    %172 = arith.addf %170, %171 : vector<2x16x256xf32>
    %c0_37 = arith.constant 0 : index
    %c5_38 = arith.constant 5 : index
    %c0_39 = arith.constant 0 : index
    %c0_40 = arith.constant 0 : index
    %173 = vector.load %arg4[%c0_37, %c5_38, %c0_39, %c0_40] : memref<2x8x16x256xf32, #tpu.memory_space<vmem>>, vector<2x1x16x256xf32>
    %174 = vector.shape_cast %173 : vector<2x1x16x256xf32> to vector<2x16x256xf32>
    %175 = vector.shape_cast %172 : vector<2x16x256xf32> to vector<2x1x16x256xf32>
    tpu.vector_store %arg4[%c0_37, %c5_38, %c0_39, %c0_40], %175 {strides = array<i32>} : memref<2x8x16x256xf32, #tpu.memory_space<vmem>>, vector<2x1x16x256xf32>,
    %176 = vector.broadcast %33 : f32 to vector<2x16x256xf32>
    %177 = arith.mulf %176, %133 : vector<2x16x256xf32>
    %178 = vector.broadcast %41 : f32 to vector<2x16x256xf32>
    %179 = arith.addf %177, %178 : vector<2x16x256xf32>
    %c0_41 = arith.constant 0 : index
    %c6_42 = arith.constant 6 : index
    %c0_43 = arith.constant 0 : index
    %c0_44 = arith.constant 0 : index
    %180 = vector.load %arg4[%c0_41, %c6_42, %c0_43, %c0_44] : memref<2x8x16x256xf32, #tpu.memory_space<vmem>>, vector<2x1x16x256xf32>
    %181 = vector.shape_cast %180 : vector<2x1x16x256xf32> to vector<2x16x256xf32>
    %182 = vector.shape_cast %179 : vector<2x16x256xf32> to vector<2x1x16x256xf32>
    tpu.vector_store %arg4[%c0_41, %c6_42, %c0_43, %c0_44], %182 {strides = array<i32>} : memref<2x8x16x256xf32, #tpu.memory_space<vmem>>, vector<2x1x16x256xf32>,
    %183 = vector.broadcast %34 : f32 to vector<2x16x256xf32>
    %184 = arith.mulf %183, %133 : vector<2x16x256xf32>
    %185 = vector.broadcast %42 : f32 to vector<2x16x256xf32>
    %186 = arith.addf %184, %185 : vector<2x16x256xf32>
    %c0_45 = arith.constant 0 : index
    %c7_46 = arith.constant 7 : index
    %c0_47 = arith.constant 0 : index
    %c0_48 = arith.constant 0 : index
    %187 = vector.load %arg4[%c0_45, %c7_46, %c0_47, %c0_48] : memref<2x8x16x256xf32, #tpu.memory_space<vmem>>, vector<2x1x16x256xf32>
    %188 = vector.shape_cast %187 : vector<2x1x16x256xf32> to vector<2x16x256xf32>
    %189 = vector.shape_cast %186 : vector<2x16x256xf32> to vector<2x1x16x256xf32>
    tpu.vector_store %arg4[%c0_45, %c7_46, %c0_47, %c0_48], %189 {strides = array<i32>} : memref<2x8x16x256xf32, #tpu.memory_space<vmem>>, vector<2x1x16x256xf32>,
    %c0_49 = arith.constant 0 : index
    %c0_50 = arith.constant 0 : index
    %c0_51 = arith.constant 0 : index
    %c0_52 = arith.constant 0 : index
    %190 = vector.load %arg5[%c0_49, %c0_50, %c0_51, %c0_52] : memref<2x1x16x256xf32, #tpu.memory_space<vmem>>, vector<2x1x16x256xf32>
    %191 = vector.shape_cast %190 : vector<2x1x16x256xf32> to vector<2x16x256xf32>
    %192 = vector.shape_cast %132 : vector<2x16x256xf32> to vector<2x1x16x256xf32>
    tpu.vector_store %arg5[%c0_49, %c0_50, %c0_51, %c0_52], %192 {strides = array<i32>} : memref<2x1x16x256xf32, #tpu.memory_space<vmem>>, vector<2x1x16x256xf32>,
    return
  }
  func.func @transform_0(%arg0: i32, %arg1: memref<42xf32, #tpu.memory_space<smem>>) -> (i32, i32) {
    %c0_i32 = arith.constant 0 : i32
    %c0_i32_0 = arith.constant 0 : i32
    %c0_i32_1 = arith.constant 0 : i32
    return %c0_i32, %c0_i32_0 : i32, i32
  }
  func.func @transform_1(%arg0: i32, %arg1: memref<42xf32, #tpu.memory_space<smem>>) -> (i32, i32, i32) {
    %c0_i32 = arith.constant 0 : i32
    %c0_i32_0 = arith.constant 0 : i32
    %c0_i32_1 = arith.constant 0 : i32
    return %arg0, %c0_i32, %c0_i32_0 : i32, i32, i32
  }
  func.func @transform_2(%arg0: i32, %arg1: memref<42xf32, #tpu.memory_space<smem>>) -> (i32, i32, i32, i32) {
    %c0_i32 = arith.constant 0 : i32
    %c0_i32_0 = arith.constant 0 : i32
    %c0_i32_1 = arith.constant 0 : i32
    %c0_i32_2 = arith.constant 0 : i32
    return %arg0, %c0_i32, %c0_i32_0, %c0_i32_1 : i32, i32, i32, i32
  }
  func.func @transform_3(%arg0: i32, %arg1: memref<42xf32, #tpu.memory_space<smem>>) -> (i32, i32, i32, i32) {
    %c0_i32 = arith.constant 0 : i32
    %c0_i32_0 = arith.constant 0 : i32
    %c0_i32_1 = arith.constant 0 : i32
    %c0_i32_2 = arith.constant 0 : i32
    return %arg0, %c0_i32, %c0_i32_0, %c0_i32_1 : i32, i32, i32, i32
  }
}

</mosaic_0001>

<llo_original>
// kernel: nlos_pose_forward.1
$region0: #{nlos_pose_forward.1}
  #allocation0 [shape = 'u32[]', space=smem, size = 0x4, offset = 0x4, fixed_abs, tag = 'smem constant byte address 0x4 - core index']
  #allocation1 [shape = 'u32[144,128]{1,0:T(1,128)}', space=vmem, size = 0x12000, scoped, tag = 'internal scratch']
  #allocation2 [shape = 's32[1]{0}', space=sflag, size = 0x4, scoped, tag = 'scoped memory for nlos_pose_forward.1']
  #allocation3 [shape = 'u8[512]{0}', space=smem, size = 0x200, scoped, tag = 'prefetched SMEM operand 0']
  %s0 = inlined_call_operand.hbm [shape: f32[42], index: 0, kind: input, shape index: {}]
  %s1 = inlined_call_operand.hbm [shape: f32[16,16], index: 1, kind: input, shape index: {}]
  %s2 = inlined_call_operand.vmem [shape: f32[2,16,256], index: 2, kind: input, shape index: {}]
  %s3 = inlined_call_operand.vmem [shape: f32[2,8,16,256], index: 3, kind: output, shape index: {0}]
  %s4 = inlined_call_operand.vmem [shape: f32[2,1,16,256], index: 4, kind: output, shape index: {1}]
  %5 = xla_tuple %s3, %s4
  %s6 = sld [smem:[#allocation0]]
  $region30: #{nlos_pose_forward.1} parent=0
    _
  %s8 = ssub.s32 1, %s6
  %s9 = scalar_select 0, %s8, %s6
  %11 = dma.hbm_to_smem %s0, 16, [#allocation3], [#allocation2]
  %12 = dma.done [#allocation2], 16
  %13 = sfence
  $region1: #{nlos_pose_forward.1} parent=0
    #allocation4 [shape = 'u8[8192]{0}', space=vmem, size = 0x2000, scoped, tag = 'input window, operand 1, single buffered']
    #allocation5 [shape = 's32[1]{0}', space=sflag, size = 0x4, scoped, tag = 'scoped memory for nlos_pose_forward.1']
    %14 = vsyncpa [#allocation5], 0
    // Predicated region
    $region2: #{nlos_pose_forward.1} parent=1 // pred_check
      _
    $region3: #{nlos_pose_forward.1} parent=1 // pred_check_branch
      %16 = sbr.rel (0) target = $region5
    $region4: #{nlos_pose_forward.1} parent=1 // pred_region
      %s18 = ssub.s32 256, 256
      %19 = vsyncadd [#allocation5], %s18
      %s20 = sshll.u32 [#allocation4], 4
      %s21 = int_to_ptr.vmem [resolvable:$true] %s20
      %26 = dma.hbm_to_vmem [thread:$0]  %s1, 256, %s21, [#allocation5], 128, 128, 8
    $region5: #{nlos_pose_forward.1} parent=1 // pred_fallthru
      _
    // Predicated region
    $region6: #{nlos_pose_forward.1} parent=1 // pred_check
      _
    $region7: #{nlos_pose_forward.1} parent=1 // pred_check_branch
      %28 = sbr.rel (0) target = $region9
    $region8: #{nlos_pose_forward.1} parent=1 // pred_region
      _
    $region9: #{nlos_pose_forward.1} parent=1 // pred_fallthru
      _
    // Predicated region
    $region10: #{nlos_pose_forward.1} parent=1 // pred_check
      _
    $region11: #{nlos_pose_forward.1} parent=1 // pred_check_branch
      %30 = sbr.rel (0) target = $region13
    $region12: #{nlos_pose_forward.1} parent=1 // pred_region
      %31 = dma.done [#allocation5], 256
    $region13: #{nlos_pose_forward.1} parent=1 // pred_fallthru
      _
    %v32 = vld [vmem:[%s2] sm:$0xff]
    %v33 = vld [vmem:[%s2 + $0x8] sm:$0xff]
    %v34 = vld [vmem:[%s2 + $0x10] sm:$0xff]
    %v35 = vld [vmem:[%s2 + $0x18] sm:$0xff]
    %v36 = vld [vmem:[%s2 + $0x20] sm:$0xff]
    %v37 = vld [vmem:[%s2 + $0x28] sm:$0xff]
    %v38 = vld [vmem:[%s2 + $0x30] sm:$0xff]
    %v39 = vld [vmem:[%s2 + $0x38] sm:$0xff]
    %s40 = sld [smem:[#allocation3]]
    %s41 = sld [smem:[#allocation3 + $0x1]]
    %s42 = sld [smem:[#allocation3 + $0x2]]
    %s43 = sld [smem:[#allocation3 + $0x3]]
    %s44 = sld [smem:[#allocation3 + $0x4]]
    %s45 = sld [smem:[#allocation3 + $0x5]]
    %s46 = sld [smem:[#allocation3 + $0x6]]
    %s47 = sld [smem:[#allocation3 + $0x7]]
    %s48 = sld [smem:[#allocation3 + $0x8]]
    %s49 = sld [smem:[#allocation3 + $0x9]]
    %s50 = sld [smem:[#allocation3 + $0xa]]
    %s51 = sld [smem:[#allocation3 + $0xb]]
    %s52 = sld [smem:[#allocation3 + $0xc]]
    %s53 = sld [smem:[#allocation3 + $0xd]]
    %s54 = sld [smem:[#allocation3 + $0xe]]
    %s55 = sld [smem:[#allocation3 + $0xf]]
    %s56 = sld [smem:[#allocation3 + $0x10]]
    %s57 = sld [smem:[#allocation3 + $0x11]]
    %s58 = sld [smem:[#allocation3 + $0x12]]
    %s59 = sld [smem:[#allocation3 + $0x13]]
    %s60 = sld [smem:[#allocation3 + $0x14]]
    %s61 = sld [smem:[#allocation3 + $0x15]]
    %s62 = sld [smem:[#allocation3 + $0x16]]
    %s63 = sld [smem:[#allocation3 + $0x17]]
    %s64 = sld [smem:[#allocation3 + $0x18]]
    %s65 = sld [smem:[#allocation3 + $0x19]]
    %s66 = sld [smem:[#allocation3 + $0x1a]]
    %s67 = sld [smem:[#allocation3 + $0x1b]]
    %s68 = sld [smem:[#allocation3 + $0x1c]]
    %s69 = sld [smem:[#allocation3 + $0x1d]]
    %s70 = sld [smem:[#allocation3 + $0x1e]]
    %s71 = sld [smem:[#allocation3 + $0x1f]]
    %s72 = sld [smem:[#allocation3 + $0x20]]
    %s73 = sld [smem:[#allocation3 + $0x21]]
    %s74 = sld [smem:[#allocation3 + $0x22]]
    %s75 = sld [smem:[#allocation3 + $0x23]]
    %s76 = sld [smem:[#allocation3 + $0x24]]
    %s77 = sld [smem:[#allocation3 + $0x25]]
    %s78 = sld [smem:[#allocation3 + $0x26]]
    %s79 = sld [smem:[#allocation3 + $0x27]]
    %s80 = sld [smem:[#allocation3 + $0x28]]
    %s81 = sld [smem:[#allocation3 + $0x29]]
    %v82 = vstv %s40
    %v83 = vmul.f32 %v82, %v32
    %v84 = vmul.f32 %v82, %v33
    %v85 = vmul.f32 %v82, %v34
    %v86 = vmul.f32 %v82, %v35
    %v87 = vmul.f32 %v82, %v36
    %v88 = vmul.f32 %v82, %v37
    %v89 = vmul.f32 %v82, %v38
    %v90 = vmul.f32 %v82, %v39
    %v91 = vstv %s44
    %v92 = vadd.f32 %v83, %v91
    %v93 = vadd.f32 %v84, %v91
    %v94 = vadd.f32 %v85, %v91
    %v95 = vadd.f32 %v86, %v91
    %v96 = vadd.f32 %v87, %v91
    %v97 = vadd.f32 %v88, %v91
    %v98 = vadd.f32 %v89, %v91
    %v99 = vadd.f32 %v90, %v91
    %v100 = vmax.f32 %v92, 0.0
    %v101 = vmax.f32 %v93, 0.0
    %v102 = vmax.f32 %v94, 0.0
    %v103 = vmax.f32 %v95, 0.0
    %v104 = vmax.f32 %v96, 0.0
    %v105 = vmax.f32 %v97, 0.0
    %v106 = vmax.f32 %v98, 0.0
    %v107 = vmax.f32 %v99, 0.0
    %v108 = vstv %s48
    %v109 = vmul.f32 %v108, %v100
    %v110 = vmul.f32 %v108, %v101
    %v111 = vmul.f32 %v108, %v102
    %v112 = vmul.f32 %v108, %v103
    %v113 = vmul.f32 %v108, %v104
    %v114 = vmul.f32 %v108, %v105
    %v115 = vmul.f32 %v108, %v106
    %v116 = vmul.f32 %v108, %v107
    %v117 = vstv %s52
    %v118 = vadd.f32 %v109, %v117
    %v119 = vadd.f32 %v110, %v117
    %v120 = vadd.f32 %v111, %v117
    %v121 = vadd.f32 %v112, %v117
    %v122 = vadd.f32 %v113, %v117
    %v123 = vadd.f32 %v114, %v117
    %v124 = vadd.f32 %v115, %v117
    %v125 = vadd.f32 %v116, %v117
    %v126 = vstv %s41
    %v127 = vmul.f32 %v126, %v32
    %v128 = vmul.f32 %v126, %v33
    %v129 = vmul.f32 %v126, %v34
    %v130 = vmul.f32 %v126, %v35
    %v131 = vmul.f32 %v126, %v36
    %v132 = vmul.f32 %v126, %v37
    %v133 = vmul.f32 %v126, %v38
    %v134 = vmul.f32 %v126, %v39
    %v135 = vstv %s45
    %v136 = vadd.f32 %v127, %v135
    %v137 = vadd.f32 %v128, %v135
    %v138 = vadd.f32 %v129, %v135
    %v139 = vadd.f32 %v130, %v135
    %v140 = vadd.f32 %v131, %v135
    %v141 = vadd.f32 %v132, %v135
    %v142 = vadd.f32 %v133, %v135
    %v143 = vadd.f32 %v134, %v135
    %v144 = vmax.f32 %v136, 0.0
    %v145 = vmax.f32 %v137, 0.0
    %v146 = vmax.f32 %v138, 0.0
    %v147 = vmax.f32 %v139, 0.0
    %v148 = vmax.f32 %v140, 0.0
    %v149 = vmax.f32 %v141, 0.0
    %v150 = vmax.f32 %v142, 0.0
    %v151 = vmax.f32 %v143, 0.0
    %v152 = vstv %s49
    %v153 = vmul.f32 %v152, %v144
    %v154 = vmul.f32 %v152, %v145
    %v155 = vmul.f32 %v152, %v146
    %v156 = vmul.f32 %v152, %v147
    %v157 = vmul.f32 %v152, %v148
    %v158 = vmul.f32 %v152, %v149
    %v159 = vmul.f32 %v152, %v150
    %v160 = vmul.f32 %v152, %v151
    %v161 = vadd.f32 %v118, %v153
    %v162 = vadd.f32 %v119, %v154
    %v163 = vadd.f32 %v120, %v155
    %v164 = vadd.f32 %v121, %v156
    %v165 = vadd.f32 %v122, %v157
    %v166 = vadd.f32 %v123, %v158
    %v167 = vadd.f32 %v124, %v159
    %v168 = vadd.f32 %v125, %v160
    %v169 = vstv %s42
    %v170 = vmul.f32 %v169, %v32
    %v171 = vmul.f32 %v169, %v33
    %v172 = vmul.f32 %v169, %v34
    %v173 = vmul.f32 %v169, %v35
    %v174 = vmul.f32 %v169, %v36
    %v175 = vmul.f32 %v169, %v37
    %v176 = vmul.f32 %v169, %v38
    %v177 = vmul.f32 %v169, %v39
    %v178 = vstv %s46
    %v179 = vadd.f32 %v170, %v178
    %v180 = vadd.f32 %v171, %v178
    %v181 = vadd.f32 %v172, %v178
    %v182 = vadd.f32 %v173, %v178
    %v183 = vadd.f32 %v174, %v178
    %v184 = vadd.f32 %v175, %v178
    %v185 = vadd.f32 %v176, %v178
    %v186 = vadd.f32 %v177, %v178
    %v187 = vmax.f32 %v179, 0.0
    %v188 = vmax.f32 %v180, 0.0
    %v189 = vmax.f32 %v181, 0.0
    %v190 = vmax.f32 %v182, 0.0
    %v191 = vmax.f32 %v183, 0.0
    %v192 = vmax.f32 %v184, 0.0
    %v193 = vmax.f32 %v185, 0.0
    %v194 = vmax.f32 %v186, 0.0
    %v195 = vstv %s50
    %v196 = vmul.f32 %v195, %v187
    %v197 = vmul.f32 %v195, %v188
    %v198 = vmul.f32 %v195, %v189
    %v199 = vmul.f32 %v195, %v190
    %v200 = vmul.f32 %v195, %v191
    %v201 = vmul.f32 %v195, %v192
    %v202 = vmul.f32 %v195, %v193
    %v203 = vmul.f32 %v195, %v194
    %v204 = vadd.f32 %v161, %v196
    %v205 = vadd.f32 %v162, %v197
    %v206 = vadd.f32 %v163, %v198
    %v207 = vadd.f32 %v164, %v199
    %v208 = vadd.f32 %v165, %v200
    %v209 = vadd.f32 %v166, %v201
    %v210 = vadd.f32 %v167, %v202
    %v211 = vadd.f32 %v168, %v203
    %v212 = vstv %s43
    %v213 = vmul.f32 %v212, %v32
    %v214 = vmul.f32 %v212, %v33
    %v215 = vmul.f32 %v212, %v34
    %v216 = vmul.f32 %v212, %v35
    %v217 = vmul.f32 %v212, %v36
    %v218 = vmul.f32 %v212, %v37
    %v219 = vmul.f32 %v212, %v38
    %v220 = vmul.f32 %v212, %v39
    %v221 = vstv %s47
    %v222 = vadd.f32 %v213, %v221
    %v223 = vadd.f32 %v214, %v221
    %v224 = vadd.f32 %v215, %v221
    %v225 = vadd.f32 %v216, %v221
    %v226 = vadd.f32 %v217, %v221
    %v227 = vadd.f32 %v218, %v221
    %v228 = vadd.f32 %v219, %v221
    %v229 = vadd.f32 %v220, %v221
    %v230 = vmax.f32 %v222, 0.0
    %v231 = vmax.f32 %v223, 0.0
    %v232 = vmax.f32 %v224, 0.0
    %v233 = vmax.f32 %v225, 0.0
    %v234 = vmax.f32 %v226, 0.0
    %v235 = vmax.f32 %v227, 0.0
    %v236 = vmax.f32 %v228, 0.0
    %v237 = vmax.f32 %v229, 0.0
    %v238 = vstv %s51
    %v239 = vmul.f32 %v238, %v230
    %v240 = vmul.f32 %v238, %v231
    %v241 = vmul.f32 %v238, %v232
    %v242 = vmul.f32 %v238, %v233
    %v243 = vmul.f32 %v238, %v234
    %v244 = vmul.f32 %v238, %v235
    %v245 = vmul.f32 %v238, %v236
    %v246 = vmul.f32 %v238, %v237
    %v247 = vadd.f32 %v204, %v239
    %v248 = vadd.f32 %v205, %v240
    %v249 = vadd.f32 %v206, %v241
    %v250 = vadd.f32 %v207, %v242
    %v251 = vadd.f32 %v208, %v243
    %v252 = vadd.f32 %v209, %v244
    %v253 = vadd.f32 %v210, %v245
    %v254 = vadd.f32 %v211, %v246
    %v255 = vld [vmem:[#allocation4] sm:$0xff]
    %v256 = vld [vmem:[#allocation4 + $0x8] sm:$0xff]
    %vm257 = vcmask 130048
    %v259 = vsel %vm257, %v255, 0
    %v262 = vsel %vm257, %v256, 0
    %264 = vmatprep.subr.mxu0 %v248
    %265 = vmatpush1.msra.mxu0 %v247
    %266 = vmatprep.subr.mxu0 %v250
    %267 = vmatpush1.msra.mxu0 %v249
    %268 = vmatprep.subr.mxu0 0.0
    %269 = vmatpush1.msra.mxu0 0.0
    %270 = vmatprep.subr.mxu0 0.0
    %271 = vmatpush1.msra.mxu0 0.0
    %272 = vmatprep.subr.mxu0 0.0
    %273 = vmatpush1.msra.mxu0 0.0
    %274 = vmatprep.subr.mxu0 0.0
    %275 = vmatpush1.msra.mxu0 0.0
    %276 = vmatprep.subr.mxu0 0.0
    %277 = vmatpush1.msra.mxu0 0.0
    %278 = vmatprep.subr.mxu0 0.0
    %279 = vmatpush1.msra.mxu0 0.0
    %280 = vmatprep.subr.mxu0 0.0
    %281 = vmatpush1.msra.mxu0 0.0
    %282 = vmatprep.subr.mxu0 0.0
    %283 = vmatpush1.msra.mxu0 0.0
    %284 = vmatprep.subr.mxu0 0.0
    %285 = vmatpush1.msra.mxu0 0.0
    %286 = vmatprep.subr.mxu0 0.0
    %287 = vmatpush1.msra.mxu0 0.0
    %288 = vmatprep.subr.mxu0 0.0
    %289 = vmatpush1.msra.mxu0 0.0
    %290 = vmatprep.subr.mxu0 0.0
    %291 = vmatpush1.msra.mxu0 0.0
    %292 = vmatprep.subr.mxu0 0.0
    %293 = vmatpush1.msra.mxu0 0.0
    %294 = vmatprep.subr.mxu0 0.0
    %295 = vmatpush1.msra.mxu0 0.0
    %296 = vmatprep.subr.mxu0 0.0
    %297 = vmatpush1.msra.mxu0 0.0
    %298 = vmatprep.subr.mxu0 0.0
    %299 = vmatpush1.msra.mxu0 0.0
    %300 = vmatprep.subr.mxu0 0.0
    %301 = vmatpush1.msra.mxu0 0.0
    %302 = vmatprep.subr.mxu0 0.0
    %303 = vmatpush1.msra.mxu0 0.0
    %304 = vmatprep.subr.mxu0 0.0
    %305 = vmatpush1.msra.mxu0 0.0
    %306 = vmatprep.subr.mxu0 0.0
    %307 = vmatpush1.msra.mxu0 0.0
    %308 = vmatprep.subr.mxu0 0.0
    %309 = vmatpush1.msra.mxu0 0.0
    %310 = vmatprep.subr.mxu0 0.0
    %311 = vmatpush1.msra.mxu0 0.0
    %312 = vmatprep.subr.mxu0 0.0
    %313 = vmatpush1.msra.mxu0 0.0
    %314 = vmatprep.subr.mxu0 0.0
    %315 = vmatpush1.msra.mxu0 0.0
    %316 = vmatprep.subr.mxu0 0.0
    %317 = vmatpush1.msra.mxu0 0.0
    %318 = vmatprep.subr.mxu0 0.0
    %319 = vmatpush1.msra.mxu0 0.0
    %320 = vmatprep.subr.mxu0 0.0
    %321 = vmatpush1.msra.mxu0 0.0
    %322 = vmatprep.subr.mxu0 0.0
    %323 = vmatpush1.msra.mxu0 0.0
    %324 = vmatprep.subr.mxu0 0.0
    %325 = vmatpush1.msra.mxu0 0.0
    %326 = vmatprep.subr.mxu0 0.0
    %327 = vmatpush1.msra.mxu0 0.0
    %328 = vmatprep.mubr.f32.mxu0 0.0
    %329 = vmatmul.mubr.f32.gmra.mrb[0].mxu0 %v259
    %v330 = vpop.f32.mrb[0].mxu0
    %v331 = vadd.f32 0.0, %v330
    %v332 = vpop.f32.mrb[0].mxu0
    %v333 = vadd.f32 0.0, %v332
    %334 = vmatprep.mubr.f32.mxu0 0.0
    %335 = vmatmul.mubr.f32.gmra.mrb[0].mxu0 %v262
    %v336 = vpop.f32.mrb[0].mxu0
    %v337 = vadd.f32 0.0, %v336
    %v338 = vpop.f32.mrb[0].mxu0
    %v339 = vadd.f32 0.0, %v338
    %340 = vdwg.mxu0
    %341 = vmatprep.subr.mxu0 %v252
    %342 = vmatpush1.msra.mxu0 %v251
    %343 = vmatprep.subr.mxu0 %v254
    %344 = vmatpush1.msra.mxu0 %v253
    %345 = vmatprep.subr.mxu0 0.0
    %346 = vmatpush1.msra.mxu0 0.0
    %347 = vmatprep.subr.mxu0 0.0
    %348 = vmatpush1.msra.mxu0 0.0
    %349 = vmatprep.subr.mxu0 0.0
    %350 = vmatpush1.msra.mxu0 0.0
    %351 = vmatprep.subr.mxu0 0.0
    %352 = vmatpush1.msra.mxu0 0.0
    %353 = vmatprep.subr.mxu0 0.0
    %354 = vmatpush1.msra.mxu0 0.0
    %355 = vmatprep.subr.mxu0 0.0
    %356 = vmatpush1.msra.mxu0 0.0
    %357 = vmatprep.subr.mxu0 0.0
    %358 = vmatpush1.msra.mxu0 0.0
    %359 = vmatprep.subr.mxu0 0.0
    %360 = vmatpush1.msra.mxu0 0.0
    %361 = vmatprep.subr.mxu0 0.0
    %362 = vmatpush1.msra.mxu0 0.0
    %363 = vmatprep.subr.mxu0 0.0
    %364 = vmatpush1.msra.mxu0 0.0
    %365 = vmatprep.subr.mxu0 0.0
    %366 = vmatpush1.msra.mxu0 0.0
    %367 = vmatprep.subr.mxu0 0.0
    %368 = vmatpush1.msra.mxu0 0.0
    %369 = vmatprep.subr.mxu0 0.0
    %370 = vmatpush1.msra.mxu0 0.0
    %371 = vmatprep.subr.mxu0 0.0
    %372 = vmatpush1.msra.mxu0 0.0
    %373 = vmatprep.subr.mxu0 0.0
    %374 = vmatpush1.msra.mxu0 0.0
    %375 = vmatprep.subr.mxu0 0.0
    %376 = vmatpush1.msra.mxu0 0.0
    %377 = vmatprep.subr.mxu0 0.0
    %378 = vmatpush1.msra.mxu0 0.0
    %379 = vmatprep.subr.mxu0 0.0
    %380 = vmatpush1.msra.mxu0 0.0
    %381 = vmatprep.subr.mxu0 0.0
    %382 = vmatpush1.msra.mxu0 0.0
    %383 = vmatprep.subr.mxu0 0.0
    %384 = vmatpush1.msra.mxu0 0.0
    %385 = vmatprep.subr.mxu0 0.0
    %386 = vmatpush1.msra.mxu0 0.0
    %387 = vmatprep.subr.mxu0 0.0
    %388 = vmatpush1.msra.mxu0 0.0
    %389 = vmatprep.subr.mxu0 0.0
    %390 = vmatpush1.msra.mxu0 0.0
    %391 = vmatprep.subr.mxu0 0.0
    %392 = vmatpush1.msra.mxu0 0.0
    %393 = vmatprep.subr.mxu0 0.0
    %394 = vmatpush1.msra.mxu0 0.0
    %395 = vmatprep.subr.mxu0 0.0
    %396 = vmatpush1.msra.mxu0 0.0
    %397 = vmatprep.subr.mxu0 0.0
    %398 = vmatpush1.msra.mxu0 0.0
    %399 = vmatprep.subr.mxu0 0.0
    %400 = vmatpush1.msra.mxu0 0.0
    %401 = vmatprep.subr.mxu0 0.0
    %402 = vmatpush1.msra.mxu0 0.0
    %403 = vmatprep.subr.mxu0 0.0
    %404 = vmatpush1.msra.mxu0 0.0
    %405 = vmatprep.mubr.f32.mxu0 0.0
    %406 = vmatmul.mubr.f32.gmra.mrb[0].mxu0 %v259
    %v407 = vpop.f32.mrb[0].mxu0
    %v408 = vadd.f32 0.0, %v407
    %v409 = vpop.f32.mrb[0].mxu0
    %v410 = vadd.f32 0.0, %v409
    %411 = vmatprep.mubr.f32.mxu0 0.0
    %412 = vmatmul.mubr.f32.gmra.mrb[0].mxu0 %v262
    %v413 = vpop.f32.mrb[0].mxu0
    %v414 = vadd.f32 0.0, %v413
    %v415 = vpop.f32.mrb[0].mxu0
    %v416 = vadd.f32 0.0, %v415
    %417 = vdwg.mxu0
    %v418 = vand.u32 2147483647, %v331
    %v419 = vand.u32 2147483647, %v333
    %v420 = vand.u32 2147483647, %v337
    %v421 = vand.u32 2147483647, %v339
    %v422 = vand.u32 2147483647, %v408
    %v423 = vand.u32 2147483647, %v410
    %v424 = vand.u32 2147483647, %v414
    %v425 = vand.u32 2147483647, %v416
    %v426 = vmax.f32 %v418, %v419
    %427 = vmax.xlane.f32.xlu0 %v426
    %v428 = vpop.xlane.xlu0 %427
    %v429 = vmax.f32 %v420, %v421
    %430 = vmax.xlane.f32.xlu0 %v429
    %v431 = vpop.xlane.xlu0 %430
    %v432 = vmax.f32 %v422, %v423
    %433 = vmax.xlane.f32.xlu0 %v432
    %v434 = vpop.xlane.xlu0 %433
    %v435 = vmax.f32 %v424, %v425
    %436 = vmax.xlane.f32.xlu0 %v435
    %v437 = vpop.xlane.xlu0 %436
    %v438 = vmax.f32 %v428, %v431
    %v439 = vrot.slane %v438, 4
    %v440 = vmax.f32 %v438, %v439
    %v441 = vrot.slane %v440, 2
    %v442 = vmax.f32 %v440, %v441
    %v443 = vrot.slane %v442, 1
    %v444 = vmax.f32 %v442, %v443
    %v445 = vmax.f32 %v434, %v437
    %v446 = vrot.slane %v445, 4
    %v447 = vmax.f32 %v445, %v446
    %v448 = vrot.slane %v447, 2
    %v449 = vmax.f32 %v447, %v448
    %v450 = vrot.slane %v449, 1
    %v451 = vmax.f32 %v449, %v450
    %v452 = vadd.f32 %v444, 1e-08
    %v453 = vadd.f32 %v451, 1e-08
    %v454 = vrcp.pop %v452
    %v455 = vmul.f32 1.0, %v454
    %v456 = vrcp.pop %v453
    %v457 = vmul.f32 1.0, %v456
    %v458 = vmul.f32 %v331, %v455
    %v459 = vmul.f32 %v333, %v455
    %v460 = vmul.f32 %v337, %v455
    %v461 = vmul.f32 %v339, %v455
    %v462 = vmul.f32 %v408, %v457
    %v463 = vmul.f32 %v410, %v457
    %v464 = vmul.f32 %v414, %v457
    %v465 = vmul.f32 %v416, %v457
    %v466 = vstv %s53
    %v467 = vmul.f32 %v466, %v458
    %v468 = vmul.f32 %v466, %v459
    %v469 = vmul.f32 %v466, %v460
    %v470 = vmul.f32 %v466, %v461
    %v471 = vmul.f32 %v466, %v462
    %v472 = vmul.f32 %v466, %v463
    %v473 = vmul.f32 %v466, %v464
    %v474 = vmul.f32 %v466, %v465
    %v475 = vstv %s57
    %v476 = vadd.f32 %v467, %v475
    %v477 = vadd.f32 %v468, %v475
    %v478 = vadd.f32 %v469, %v475
    %v479 = vadd.f32 %v470, %v475
    %v480 = vadd.f32 %v471, %v475
    %v481 = vadd.f32 %v472, %v475
    %v482 = vadd.f32 %v473, %v475
    %v483 = vadd.f32 %v474, %v475
    %v484 = vmax.f32 %v476, 0.0
    %v485 = vmax.f32 %v477, 0.0
    %v486 = vmax.f32 %v478, 0.0
    %v487 = vmax.f32 %v479, 0.0
    %v488 = vmax.f32 %v480, 0.0
    %v489 = vmax.f32 %v481, 0.0
    %v490 = vmax.f32 %v482, 0.0
    %v491 = vmax.f32 %v483, 0.0
    %v492 = vstv %s61
    %v493 = vmul.f32 %v492, %v484
    %v494 = vmul.f32 %v492, %v485
    %v495 = vmul.f32 %v492, %v486
    %v496 = vmul.f32 %v492, %v487
    %v497 = vmul.f32 %v492, %v488
    %v498 = vmul.f32 %v492, %v489
    %v499 = vmul.f32 %v492, %v490
    %v500 = vmul.f32 %v492, %v491
    %v501 = vstv %s65
    %v502 = vadd.f32 %v493, %v501
    %v503 = vadd.f32 %v494, %v501
    %v504 = vadd.f32 %v495, %v501
    %v505 = vadd.f32 %v496, %v501
    %v506 = vadd.f32 %v497, %v501
    %v507 = vadd.f32 %v498, %v501
    %v508 = vadd.f32 %v499, %v501
    %v509 = vadd.f32 %v500, %v501
    %v510 = vstv %s54
    %v511 = vmul.f32 %v510, %v458
    %v512 = vmul.f32 %v510, %v459
    %v513 = vmul.f32 %v510, %v460
    %v514 = vmul.f32 %v510, %v461
    %v515 = vmul.f32 %v510, %v462
    %v516 = vmul.f32 %v510, %v463
    %v517 = vmul.f32 %v510, %v464
    %v518 = vmul.f32 %v510, %v465
    %v519 = vstv %s58
    %v520 = vadd.f32 %v511, %v519
    %v521 = vadd.f32 %v512, %v519
    %v522 = vadd.f32 %v513, %v519
    %v523 = vadd.f32 %v514, %v519
    %v524 = vadd.f32 %v515, %v519
    %v525 = vadd.f32 %v516, %v519
    %v526 = vadd.f32 %v517, %v519
    %v527 = vadd.f32 %v518, %v519
    %v528 = vmax.f32 %v520, 0.0
    %v529 = vmax.f32 %v521, 0.0
    %v530 = vmax.f32 %v522, 0.0
    %v531 = vmax.f32 %v523, 0.0
    %v532 = vmax.f32 %v524, 0.0
    %v533 = vmax.f32 %v525, 0.0
    %v534 = vmax.f32 %v526, 0.0
    %v535 = vmax.f32 %v527, 0.0
    %v536 = vstv %s62
    %v537 = vmul.f32 %v536, %v528
    %v538 = vmul.f32 %v536, %v529
    %v539 = vmul.f32 %v536, %v530
    %v540 = vmul.f32 %v536, %v531
    %v541 = vmul.f32 %v536, %v532
    %v542 = vmul.f32 %v536, %v533
    %v543 = vmul.f32 %v536, %v534
    %v544 = vmul.f32 %v536, %v535
    %v545 = vadd.f32 %v502, %v537
    %v546 = vadd.f32 %v503, %v538
    %v547 = vadd.f32 %v504, %v539
    %v548 = vadd.f32 %v505, %v540
    %v549 = vadd.f32 %v506, %v541
    %v550 = vadd.f32 %v507, %v542
    %v551 = vadd.f32 %v508, %v543
    %v552 = vadd.f32 %v509, %v544
    %v553 = vstv %s55
    %v554 = vmul.f32 %v553, %v458
    %v555 = vmul.f32 %v553, %v459
    %v556 = vmul.f32 %v553, %v460
    %v557 = vmul.f32 %v553, %v461
    %v558 = vmul.f32 %v553, %v462
    %v559 = vmul.f32 %v553, %v463
    %v560 = vmul.f32 %v553, %v464
    %v561 = vmul.f32 %v553, %v465
    %v562 = vstv %s59
    %v563 = vadd.f32 %v554, %v562
    %v564 = vadd.f32 %v555, %v562
    %v565 = vadd.f32 %v556, %v562
    %v566 = vadd.f32 %v557, %v562
    %v567 = vadd.f32 %v558, %v562
    %v568 = vadd.f32 %v559, %v562
    %v569 = vadd.f32 %v560, %v562
    %v570 = vadd.f32 %v561, %v562
    %v571 = vmax.f32 %v563, 0.0
    %v572 = vmax.f32 %v564, 0.0
    %v573 = vmax.f32 %v565, 0.0
    %v574 = vmax.f32 %v566, 0.0
    %v575 = vmax.f32 %v567, 0.0
    %v576 = vmax.f32 %v568, 0.0
    %v577 = vmax.f32 %v569, 0.0
    %v578 = vmax.f32 %v570, 0.0
    %v579 = vstv %s63
    %v580 = vmul.f32 %v579, %v571
    %v581 = vmul.f32 %v579, %v572
    %v582 = vmul.f32 %v579, %v573
    %v583 = vmul.f32 %v579, %v574
    %v584 = vmul.f32 %v579, %v575
    %v585 = vmul.f32 %v579, %v576
    %v586 = vmul.f32 %v579, %v577
    %v587 = vmul.f32 %v579, %v578
    %v588 = vadd.f32 %v545, %v580
    %v589 = vadd.f32 %v546, %v581
    %v590 = vadd.f32 %v547, %v582
    %v591 = vadd.f32 %v548, %v583
    %v592 = vadd.f32 %v549, %v584
    %v593 = vadd.f32 %v550, %v585
    %v594 = vadd.f32 %v551, %v586
    %v595 = vadd.f32 %v552, %v587
    %v596 = vstv %s56
    %v597 = vmul.f32 %v596, %v458
    %v598 = vmul.f32 %v596, %v459
    %v599 = vmul.f32 %v596, %v460
    %v600 = vmul.f32 %v596, %v461
    %v601 = vmul.f32 %v596, %v462
    %v602 = vmul.f32 %v596, %v463
    %v603 = vmul.f32 %v596, %v464
    %v604 = vmul.f32 %v596, %v465
    %v605 = vstv %s60
    %v606 = vadd.f32 %v597, %v605
    %v607 = vadd.f32 %v598, %v605
    %v608 = vadd.f32 %v599, %v605
    %v609 = vadd.f32 %v600, %v605
    %v610 = vadd.f32 %v601, %v605
    %v611 = vadd.f32 %v602, %v605
    %v612 = vadd.f32 %v603, %v605
    %v613 = vadd.f32 %v604, %v605
    %v614 = vmax.f32 %v606, 0.0
    %v615 = vmax.f32 %v607, 0.0
    %v616 = vmax.f32 %v608, 0.0
    %v617 = vmax.f32 %v609, 0.0
    %v618 = vmax.f32 %v610, 0.0
    %v619 = vmax.f32 %v611, 0.0
    %v620 = vmax.f32 %v612, 0.0
    %v621 = vmax.f32 %v613, 0.0
    %v622 = vstv %s64
    %v623 = vmul.f32 %v622, %v614
    %v624 = vmul.f32 %v622, %v615
    %v625 = vmul.f32 %v622, %v616
    %v626 = vmul.f32 %v622, %v617
    %v627 = vmul.f32 %v622, %v618
    %v628 = vmul.f32 %v622, %v619
    %v629 = vmul.f32 %v622, %v620
    %v630 = vmul.f32 %v622, %v621
    %v631 = vadd.f32 %v588, %v623
    %v632 = vadd.f32 %v589, %v624
    %v633 = vadd.f32 %v590, %v625
    %v634 = vadd.f32 %v591, %v626
    %v635 = vadd.f32 %v592, %v627
    %v636 = vadd.f32 %v593, %v628
    %v637 = vadd.f32 %v594, %v629
    %v638 = vadd.f32 %v595, %v630
    %v639 = vadd.f32 %v458, %v631
    %v640 = vadd.f32 %v459, %v632
    %v641 = vadd.f32 %v460, %v633
    %v642 = vadd.f32 %v461, %v634
    %v643 = vadd.f32 %v462, %v635
    %v644 = vadd.f32 %v463, %v636
    %v645 = vadd.f32 %v464, %v637
    %v646 = vadd.f32 %v465, %v638
    %v647 = vstv %s66
    %v648 = vmul.f32 %v647, %v639
    %v649 = vmul.f32 %v647, %v640
    %v650 = vmul.f32 %v647, %v641
    %v651 = vmul.f32 %v647, %v642
    %v652 = vmul.f32 %v647, %v643
    %v653 = vmul.f32 %v647, %v644
    %v654 = vmul.f32 %v647, %v645
    %v655 = vmul.f32 %v647, %v646
    %v656 = vstv %s74
    %v657 = vadd.f32 %v648, %v656
    %v658 = vadd.f32 %v649, %v656
    %v659 = vadd.f32 %v650, %v656
    %v660 = vadd.f32 %v651, %v656
    %v661 = vadd.f32 %v652, %v656
    %v662 = vadd.f32 %v653, %v656
    %v663 = vadd.f32 %v654, %v656
    %v664 = vadd.f32 %v655, %v656
    %665 = vst [vmem:[%s3] sm:$0xff] %v657
    %666 = vst [vmem:[%s3 + $0x8] sm:$0xff] %v658
    %667 = vst [vmem:[%s3 + $0x10] sm:$0xff] %v659
    %668 = vst [vmem:[%s3 + $0x18] sm:$0xff] %v660
    %669 = vst [vmem:[%s3 + $0x100] sm:$0xff] %v661
    %670 = vst [vmem:[%s3 + $0x108] sm:$0xff] %v662
    %671 = vst [vmem:[%s3 + $0x110] sm:$0xff] %v663
    %672 = vst [vmem:[%s3 + $0x118] sm:$0xff] %v664
    %v673 = vstv %s67
    %v674 = vmul.f32 %v673, %v639
    %v675 = vmul.f32 %v673, %v640
    %v676 = vmul.f32 %v673, %v641
    %v677 = vmul.f32 %v673, %v642
    %v678 = vmul.f32 %v673, %v643
    %v679 = vmul.f32 %v673, %v644
    %v680 = vmul.f32 %v673, %v645
    %v681 = vmul.f32 %v673, %v646
    %v682 = vstv %s75
    %v683 = vadd.f32 %v674, %v682
    %v684 = vadd.f32 %v675, %v682
    %v685 = vadd.f32 %v676, %v682
    %v686 = vadd.f32 %v677, %v682
    %v687 = vadd.f32 %v678, %v682
    %v688 = vadd.f32 %v679, %v682
    %v689 = vadd.f32 %v680, %v682
    %v690 = vadd.f32 %v681, %v682
    %s691 = scalar_lea.vmem %s3, 32
    %692 = vst [vmem:[%s691] sm:$0xff] %v683
    %693 = vst [vmem:[%s691 + $0x8] sm:$0xff] %v684
    %694 = vst [vmem:[%s691 + $0x10] sm:$0xff] %v685
    %695 = vst [vmem:[%s691 + $0x18] sm:$0xff] %v686
    %696 = vst [vmem:[%s691 + $0x100] sm:$0xff] %v687
    %697 = vst [vmem:[%s691 + $0x108] sm:$0xff] %v688
    %698 = vst [vmem:[%s691 + $0x110] sm:$0xff] %v689
    %699 = vst [vmem:[%s691 + $0x118] sm:$0xff] %v690
    %v700 = vstv %s68
    %v701 = vmul.f32 %v700, %v639
    %v702 = vmul.f32 %v700, %v640
    %v703 = vmul.f32 %v700, %v641
    %v704 = vmul.f32 %v700, %v642
    %v705 = vmul.f32 %v700, %v643
    %v706 = vmul.f32 %v700, %v644
    %v707 = vmul.f32 %v700, %v645
    %v708 = vmul.f32 %v700, %v646
    %v709 = vstv %s76
    %v710 = vadd.f32 %v701, %v709
    %v711 = vadd.f32 %v702, %v709
    %v712 = vadd.f32 %v703, %v709
    %v713 = vadd.f32 %v704, %v709
    %v714 = vadd.f32 %v705, %v709
    %v715 = vadd.f32 %v706, %v709
    %v716 = vadd.f32 %v707, %v709
    %v717 = vadd.f32 %v708, %v709
    %s718 = scalar_lea.vmem %s3, 64
    %719 = vst [vmem:[%s718] sm:$0xff] %v710
    %720 = vst [vmem:[%s718 + $0x8] sm:$0xff] %v711
    %721 = vst [vmem:[%s718 + $0x10] sm:$0xff] %v712
    %722 = vst [vmem:[%s718 + $0x18] sm:$0xff] %v713
    %723 = vst [vmem:[%s718 + $0x100] sm:$0xff] %v714
    %724 = vst [vmem:[%s718 + $0x108] sm:$0xff] %v715
    %725 = vst [vmem:[%s718 + $0x110] sm:$0xff] %v716
    %726 = vst [vmem:[%s718 + $0x118] sm:$0xff] %v717
    %v727 = vstv %s69
    %v728 = vmul.f32 %v727, %v639
    %v729 = vmul.f32 %v727, %v640
    %v730 = vmul.f32 %v727, %v641
    %v731 = vmul.f32 %v727, %v642
    %v732 = vmul.f32 %v727, %v643
    %v733 = vmul.f32 %v727, %v644
    %v734 = vmul.f32 %v727, %v645
    %v735 = vmul.f32 %v727, %v646
    %v736 = vstv %s77
    %v737 = vadd.f32 %v728, %v736
    %v738 = vadd.f32 %v729, %v736
    %v739 = vadd.f32 %v730, %v736
    %v740 = vadd.f32 %v731, %v736
    %v741 = vadd.f32 %v732, %v736
    %v742 = vadd.f32 %v733, %v736
    %v743 = vadd.f32 %v734, %v736
    %v744 = vadd.f32 %v735, %v736
    %s745 = scalar_lea.vmem %s3, 96
    %746 = vst [vmem:[%s745] sm:$0xff] %v737
    %747 = vst [vmem:[%s745 + $0x8] sm:$0xff] %v738
    %748 = vst [vmem:[%s745 + $0x10] sm:$0xff] %v739
    %749 = vst [vmem:[%s745 + $0x18] sm:$0xff] %v740
    %750 = vst [vmem:[%s745 + $0x100] sm:$0xff] %v741
    %751 = vst [vmem:[%s745 + $0x108] sm:$0xff] %v742
    %752 = vst [vmem:[%s745 + $0x110] sm:$0xff] %v743
    %753 = vst [vmem:[%s745 + $0x118] sm:$0xff] %v744
    %v754 = vstv %s70
    %v755 = vmul.f32 %v754, %v639
    %v756 = vmul.f32 %v754, %v640
    %v757 = vmul.f32 %v754, %v641
    %v758 = vmul.f32 %v754, %v642
    %v759 = vmul.f32 %v754, %v643
    %v760 = vmul.f32 %v754, %v644
    %v761 = vmul.f32 %v754, %v645
    %v762 = vmul.f32 %v754, %v646
    %v763 = vstv %s78
    %v764 = vadd.f32 %v755, %v763
    %v765 = vadd.f32 %v756, %v763
    %v766 = vadd.f32 %v757, %v763
    %v767 = vadd.f32 %v758, %v763
    %v768 = vadd.f32 %v759, %v763
    %v769 = vadd.f32 %v760, %v763
    %v770 = vadd.f32 %v761, %v763
    %v771 = vadd.f32 %v762, %v763
    %s772 = scalar_lea.vmem %s3, 128
    %773 = vst [vmem:[%s772] sm:$0xff] %v764
    %774 = vst [vmem:[%s772 + $0x8] sm:$0xff] %v765
    %775 = vst [vmem:[%s772 + $0x10] sm:$0xff] %v766
    %776 = vst [vmem:[%s772 + $0x18] sm:$0xff] %v767
    %777 = vst [vmem:[%s772 + $0x100] sm:$0xff] %v768
    %778 = vst [vmem:[%s772 + $0x108] sm:$0xff] %v769
    %779 = vst [vmem:[%s772 + $0x110] sm:$0xff] %v770
    %780 = vst [vmem:[%s772 + $0x118] sm:$0xff] %v771
    %v781 = vstv %s71
    %v782 = vmul.f32 %v781, %v639
    %v783 = vmul.f32 %v781, %v640
    %v784 = vmul.f32 %v781, %v641
    %v785 = vmul.f32 %v781, %v642
    %v786 = vmul.f32 %v781, %v643
    %v787 = vmul.f32 %v781, %v644
    %v788 = vmul.f32 %v781, %v645
    %v789 = vmul.f32 %v781, %v646
    %v790 = vstv %s79
    %v791 = vadd.f32 %v782, %v790
    %v792 = vadd.f32 %v783, %v790
    %v793 = vadd.f32 %v784, %v790
    %v794 = vadd.f32 %v785, %v790
    %v795 = vadd.f32 %v786, %v790
    %v796 = vadd.f32 %v787, %v790
    %v797 = vadd.f32 %v788, %v790
    %v798 = vadd.f32 %v789, %v790
    %s799 = scalar_lea.vmem %s3, 160
    %800 = vst [vmem:[%s799] sm:$0xff] %v791
    %801 = vst [vmem:[%s799 + $0x8] sm:$0xff] %v792
    %802 = vst [vmem:[%s799 + $0x10] sm:$0xff] %v793
    %803 = vst [vmem:[%s799 + $0x18] sm:$0xff] %v794
    %804 = vst [vmem:[%s799 + $0x100] sm:$0xff] %v795
    %805 = vst [vmem:[%s799 + $0x108] sm:$0xff] %v796
    %806 = vst [vmem:[%s799 + $0x110] sm:$0xff] %v797
    %807 = vst [vmem:[%s799 + $0x118] sm:$0xff] %v798
    %v808 = vstv %s72
    %v809 = vmul.f32 %v808, %v639
    %v810 = vmul.f32 %v808, %v640
    %v811 = vmul.f32 %v808, %v641
    %v812 = vmul.f32 %v808, %v642
    %v813 = vmul.f32 %v808, %v643
    %v814 = vmul.f32 %v808, %v644
    %v815 = vmul.f32 %v808, %v645
    %v816 = vmul.f32 %v808, %v646
    %v817 = vstv %s80
    %v818 = vadd.f32 %v809, %v817
    %v819 = vadd.f32 %v810, %v817
    %v820 = vadd.f32 %v811, %v817
    %v821 = vadd.f32 %v812, %v817
    %v822 = vadd.f32 %v813, %v817
    %v823 = vadd.f32 %v814, %v817
    %v824 = vadd.f32 %v815, %v817
    %v825 = vadd.f32 %v816, %v817
    %s826 = scalar_lea.vmem %s3, 192
    %827 = vst [vmem:[%s826] sm:$0xff] %v818
    %828 = vst [vmem:[%s826 + $0x8] sm:$0xff] %v819
    %829 = vst [vmem:[%s826 + $0x10] sm:$0xff] %v820
    %830 = vst [vmem:[%s826 + $0x18] sm:$0xff] %v821
    %831 = vst [vmem:[%s826 + $0x100] sm:$0xff] %v822
    %832 = vst [vmem:[%s826 + $0x108] sm:$0xff] %v823
    %833 = vst [vmem:[%s826 + $0x110] sm:$0xff] %v824
    %834 = vst [vmem:[%s826 + $0x118] sm:$0xff] %v825
    %v835 = vstv %s73
    %v836 = vmul.f32 %v835, %v639
    %v837 = vmul.f32 %v835, %v640
    %v838 = vmul.f32 %v835, %v641
    %v839 = vmul.f32 %v835, %v642
    %v840 = vmul.f32 %v835, %v643
    %v841 = vmul.f32 %v835, %v644
    %v842 = vmul.f32 %v835, %v645
    %v843 = vmul.f32 %v835, %v646
    %v844 = vstv %s81
    %v845 = vadd.f32 %v836, %v844
    %v846 = vadd.f32 %v837, %v844
    %v847 = vadd.f32 %v838, %v844
    %v848 = vadd.f32 %v839, %v844
    %v849 = vadd.f32 %v840, %v844
    %v850 = vadd.f32 %v841, %v844
    %v851 = vadd.f32 %v842, %v844
    %v852 = vadd.f32 %v843, %v844
    %s853 = scalar_lea.vmem %s3, 224
    %854 = vst [vmem:[%s853] sm:$0xff] %v845
    %855 = vst [vmem:[%s853 + $0x8] sm:$0xff] %v846
    %856 = vst [vmem:[%s853 + $0x10] sm:$0xff] %v847
    %857 = vst [vmem:[%s853 + $0x18] sm:$0xff] %v848
    %858 = vst [vmem:[%s853 + $0x100] sm:$0xff] %v849
    %859 = vst [vmem:[%s853 + $0x108] sm:$0xff] %v850
    %860 = vst [vmem:[%s853 + $0x110] sm:$0xff] %v851
    %861 = vst [vmem:[%s853 + $0x118] sm:$0xff] %v852
    %862 = vst [vmem:[%s4] sm:$0xff] %v631
    %863 = vst [vmem:[%s4 + $0x8] sm:$0xff] %v632
    %864 = vst [vmem:[%s4 + $0x10] sm:$0xff] %v633
    %865 = vst [vmem:[%s4 + $0x18] sm:$0xff] %v634
    %866 = vst [vmem:[%s4 + $0x20] sm:$0xff] %v635
    %867 = vst [vmem:[%s4 + $0x28] sm:$0xff] %v636
    %868 = vst [vmem:[%s4 + $0x30] sm:$0xff] %v637
    %869 = vst [vmem:[%s4 + $0x38] sm:$0xff] %v638
    // Predicated region
    $region14: #{nlos_pose_forward.1} parent=1 // pred_check
      _
    $region15: #{nlos_pose_forward.1} parent=1 // pred_check_branch
      %871 = sbr.rel (0) target = $region17
    $region16: #{nlos_pose_forward.1} parent=1 // pred_region
      _
    $region17: #{nlos_pose_forward.1} parent=1 // pred_fallthru
      _
    // Predicated region
    $region18: #{nlos_pose_forward.1} parent=1 // pred_check
      _
    $region19: #{nlos_pose_forward.1} parent=1 // pred_check_branch
      %873 = sbr.rel (0) target = $region21
    $region20: #{nlos_pose_forward.1} parent=1 // pred_region
      _
    $region21: #{nlos_pose_forward.1} parent=1 // pred_fallthru
      _
    // Predicated region
    $region22: #{nlos_pose_forward.1} parent=1 // pred_check
      _
    $region23: #{nlos_pose_forward.1} parent=1 // pred_check_branch
      %875 = sbr.rel (0) target = $region25
    $region24: #{nlos_pose_forward.1} parent=1 // pred_region
      _
    $region25: #{nlos_pose_forward.1} parent=1 // pred_fallthru
      _
    // Predicated region
    $region26: #{nlos_pose_forward.1} parent=1 // pred_check
      _
    $region27: #{nlos_pose_forward.1} parent=1 // pred_check_branch
      %877 = sbr.rel (0) target = $region29
    $region28: #{nlos_pose_forward.1} parent=1 // pred_region
      _
    $region29: #{nlos_pose_forward.1} parent=1 // pred_fallthru
      _
    %878 = vsyncpa [#allocation5], 1

</llo_original>
